<compile_context>
chip_gen: v7x
topology: tpu7x:2x2x1
jax: 0.10.0
libtpu: 0.0.40
codegen_flags: <defaults>
</compile_context>

<pallas_src>
import math
import jax
import jax.numpy as jnp
from jax import lax
from jax.experimental import pallas as pl
from jax.experimental.pallas import tpu as pltpu


def _round_up(x, n):
    return ((x + n - 1) // n) * n


def _rnn_kernel(x_ref, wih_ref, whh_ref, vT_ref, out_ref, work_ref, h_carry_ref):
    """One (batch tile, time chunk):

    x_ref      : (Tc, bt, F)   raw inputs, time-major
    wih_ref    : (F, Kp)       input weight, K zero-padded to 128 (resident)
    whh_ref    : (Kp, Kp)      recurrent weight, zero-padded (resident)
    vT_ref     : (Kp, Mp)      readout weight transposed, zero-padded (resident)
    out_ref    : (Tc, bt, Mp)  lane-dense logits block
    work_ref   : (Tc, bt, Kp)  VMEM scratch: xp for this chunk, overwritten
                               in-place with the hidden states
    h_carry_ref: (bt, Kp)      VMEM scratch: hidden state carried across chunks
    """
    Tc, bt, F = x_ref.shape
    Kp = whh_ref.shape[0]
    Mp = out_ref.shape[-1]

    # Time chunks iterate innermost -> tc == 0 marks a fresh batch tile.
    @pl.when(pl.program_id(1) == 0)
    def _():
        h_carry_ref[...] = jnp.zeros_like(h_carry_ref)

    # Fused input projection (no time dependency): one tall MXU matmul for the
    # whole chunk, written straight to VMEM scratch (no HBM round trip).
    x2d = x_ref[...].reshape(Tc * bt, F)
    xp = jnp.dot(x2d, wih_ref[...], preferred_element_type=jnp.float32)
    work_ref[...] = xp.reshape(Tc, bt, Kp)

    # Hoist W_hh only while it comfortably fits the 64-vreg file
    # (16 vregs at Kp=128); larger K streams it from VMEM inside the step.
    hoist_whh = Kp <= 128
    whh = whh_ref[...] if hoist_whh else None

    def step(t, h):
        w = whh if hoist_whh else whh_ref[...]
        # Serial critical path: one (bt,Kp)x(Kp,Kp) MXU push + VPU add + EUP tanh.
        pre = work_ref[t] + jnp.dot(h, w, preferred_element_type=jnp.float32)
        h = jnp.tanh(pre)            # keep f32 (safe on v5e's f32-only VPU/EUP)
        work_ref[t] = h              # overwrite xp[t] in place with h[t]
        return h

    h_final = lax.fori_loop(0, Tc, step, h_carry_ref[...],
                            unroll=min(Tc, 8))      # bounded unroll
    h_carry_ref[...] = h_final                      # carry across time chunks

    # Batched readout: load V^T only now (outside the serial loop's live
    # range), one (Tc*bt, Kp) @ (Kp, Mp) MXU matmul + one lane-dense bulk store.
    vT = vT_ref[...]
    H = work_ref[...].reshape(Tc * bt, Kp)
    out = jnp.dot(H, vT, preferred_element_type=jnp.float32)
    out_ref[...] = out.reshape(Tc, bt, Mp).astype(out_ref.dtype)


def rnn_model_forward(inputs, w_ih, w_hh, v_weight):
    """inputs: (B, T, m+1); w_ih: (m+1, k); w_hh: (k, k); v_weight: (m, k).
    Returns logits (B, T, m), matching RNNModel.forward."""
    B, T, F = inputs.shape
    K = w_ih.shape[1]
    M = v_weight.shape[0]

    # ---- Lane padding of the hidden / readout dims to 128. Zero padding keeps
    # padded hidden lanes exactly 0 (tanh(0 + 0) = 0) and padded readout
    # columns are sliced off below. ----
    Kp = _round_up(K, 128)
    Mp = _round_up(M, 128)
    wih_p = jnp.zeros((F, Kp), jnp.float32).at[:, :K].set(w_ih)
    whh_p = jnp.zeros((Kp, Kp), jnp.float32).at[:K, :K].set(w_hh)
    vT_p = jnp.zeros((Kp, Mp), jnp.float32).at[:K, :M].set(jnp.transpose(v_weight))

    # ---- Batch tiling: <=256-row tiles (MXU width on v6e/v7x); multiple tiles
    # (megacore-shardable on v7x) only when the batch is big enough that the
    # split does not cost padding on single-TC chips. ----
    Bp8 = _round_up(B, 8)
    n_btiles = max(1, -(-Bp8 // 256))
    bt = _round_up(-(-Bp8 // n_btiles), 8)
    Bp = bt * n_btiles

    # ---- Time chunking so VMEM scales with Tc, not T (v7x: 64 MiB VMEM). ----
    vmem_budget = 40 * 1024 * 1024
    per_t_bytes = bt * (2 * F + 2 * Mp + Kp) * 4   # 2x in blk + 2x out blk + scratch
    Tc = int(max(1, min(T, vmem_budget // per_t_bytes, 256)))
    n_tchunks = -(-T // Tc)
    Tp = Tc * n_tchunks

    # Time-major RAW inputs (F = m+1 wide, the smallest activation tensor):
    # the (T, B, K) projection intermediate never touches HBM anymore.
    x_tm = jnp.transpose(inputs, (1, 0, 2))
    x_tm = jnp.pad(x_tm, ((0, Tp - T), (0, Bp - B), (0, 0)))

    out_tbm = pl.pallas_call(
        _rnn_kernel,
        out_shape=jax.ShapeDtypeStruct((Tp, Bp, Mp), jnp.float32),
        grid_spec=pltpu.PrefetchScalarGridSpec(
            num_scalar_prefetch=0,
            grid=(n_btiles, n_tchunks),
            in_specs=[
                pl.BlockSpec((Tc, bt, F), lambda b, t: (t, b, 0)),   # raw inputs
                pl.BlockSpec((F, Kp), lambda b, t: (0, 0)),          # W_ih (resident)
                pl.BlockSpec((Kp, Kp), lambda b, t: (0, 0)),         # W_hh (resident)
                pl.BlockSpec((Kp, Mp), lambda b, t: (0, 0)),         # V^T  (resident)
            ],
            out_specs=pl.BlockSpec((Tc, bt, Mp), lambda b, t: (t, b, 0)),
            scratch_shapes=[
                pltpu.VMEM((Tc, bt, Kp), jnp.float32),   # xp / hidden states (reused)
                pltpu.VMEM((bt, Kp), jnp.float32),       # carried hidden state
            ],
        ),
        compiler_params=pltpu.CompilerParams(
            # Batch tiles are independent recurrences -> megacore-shardable on
            # v7x; the carried time-chunk axis must stay sequential.
            dimension_semantics=("parallel", "arbitrary"),
            vmem_limit_bytes=56 * 1024 * 1024,
        ),
    )(x_tm, wih_p, whh_p, vT_p)

    out = jnp.transpose(out_tbm, (1, 0, 2))      # (Bp, Tp, Mp); logits are tiny
    return out[:B, :T, :M]


def init_params(key, m, k):
    """Deterministic init matching the PyTorch module's reset_parameters ranges."""
    k1, k2, k3 = jax.random.split(key, 3)
    bound_rnn = math.sqrt(1.0 / k)
    bound_lin = math.sqrt(1.0 / k)   # MyLinear: in_features = k
    w_ih = jax.random.uniform(k1, (m + 1, k), jnp.float32, -bound_rnn, bound_rnn)
    w_hh = jax.random.uniform(k2, (k, k), jnp.float32, -bound_rnn, bound_rnn)
    v_w = jax.random.uniform(k3, (m, k), jnp.float32, -bound_lin, bound_lin)
    return w_ih, w_hh, v_w


def _reference_forward(inputs, w_ih, w_hh, v_weight):
    """Pure-JAX reference identical to the PyTorch forward (for sanity check)."""
    B, T, _ = inputs.shape
    K = w_ih.shape[1]
    state = jnp.zeros((B, K), jnp.float32)
    outs = []
    for t in range(T):
        state = jnp.tanh(inputs[:, t, :] @ w_ih + state @ w_hh)
        outs.append(state @ v_weight.T)
    return jnp.stack(outs, axis=1)


if __name__ == "__main__":
    # TODO(synk): RNNModel.loss (CrossEntropyLoss) is not part of forward() and
    # is not implemented here.
    m, k = 8, 64          # RNNModel(m, k): input feature size m+1, hidden size k
    B, T = 8, 8           # small batch / sequence length

    key = jax.random.PRNGKey(0)
    pkey, xkey = jax.random.split(key)
    w_ih, w_hh, v_w = init_params(pkey, m, k)
    inputs = jax.random.normal(xkey, (B, T, m + 1), jnp.float32)

    forward = jax.jit(rnn_model_forward)
    logits = jax.block_until_ready(forward(inputs, w_ih, w_hh, v_w))

    ref = _reference_forward(inputs, w_ih, w_hh, v_w)
    assert logits.shape == (B, T, m)
    assert jnp.allclose(logits, ref, atol=1e-4, rtol=1e-4), \
        float(jnp.max(jnp.abs(logits - ref)))

    print("KERNEL_OK")
</pallas_src>

<mosaic_0001>
module attributes {stable_mosaic.version = 11 : i64} {
  func.func @_rnn_kernel(%arg0: i32, %arg1: i32, %arg2: memref<8x8x9xf32, #tpu.memory_space<vmem>>, %arg3: memref<9x128xf32, #tpu.memory_space<vmem>>, %arg4: memref<128x128xf32, #tpu.memory_space<vmem>>, %arg5: memref<128x128xf32, #tpu.memory_space<vmem>>, %arg6: memref<8x8x128xf32, #tpu.memory_space<vmem>>, %arg7: memref<8x8x128xf32, #tpu.memory_space<vmem>>, %arg8: memref<8x128xf32, #tpu.memory_space<vmem>>) attributes {dimension_semantics = [#tpu.dimension_semantics<parallel>, #tpu.dimension_semantics<arbitrary>], iteration_bounds = array<i64: 1, 1>, scalar_prefetch = 0 : i64, scratch_operands = 2 : i64, tpu.core_type = #tpu.core_type<tc>, window_params = [{transform_indices = @transform_0, window_bounds = array<i64: 8, 8, 9>}, {pipeline_mode = #tpu.pipeline_mode<synchronous>, transform_indices = @transform_1, window_bounds = array<i64: 9, 128>}, {pipeline_mode = #tpu.pipeline_mode<synchronous>, transform_indices = @transform_2, window_bounds = array<i64: 128, 128>}, {pipeline_mode = #tpu.pipeline_mode<synchronous>, transform_indices = @transform_3, window_bounds = array<i64: 128, 128>}, {transform_indices = @transform_4, window_bounds = array<i64: 8, 8, 128>}]} {
    %c0_i32 = arith.constant 0 : i32
    %0 = arith.cmpi eq, %arg1, %c0_i32 : i32
    %1 = arith.extui %0 : i1 to i32
    %c0_i32_0 = arith.constant 0 : i32
    %2 = arith.cmpi ne, %1, %c0_i32_0 : i32
    scf.if %2 {
      %cst_64 = arith.constant 0.000000e+00 : f32
      %98 = vector.broadcast %cst_64 : f32 to vector<8x128xf32>
      %c0_65 = arith.constant 0 : index
      %c0_66 = arith.constant 0 : index
      %99 = vector.load %arg8[%c0_65, %c0_66] : memref<8x128xf32, #tpu.memory_space<vmem>>, vector<8x128xf32>
      tpu.vector_store %arg8[%c0_65, %c0_66], %98 {strides = array<i32>} : memref<8x128xf32, #tpu.memory_space<vmem>>, vector<8x128xf32>,
    } else {
    }
    %c0 = arith.constant 0 : index
    %c0_1 = arith.constant 0 : index
    %c0_2 = arith.constant 0 : index
    %3 = vector.load %arg2[%c0, %c0_1, %c0_2] : memref<8x8x9xf32, #tpu.memory_space<vmem>>, vector<8x8x9xf32>
    %4 = vector.shape_cast %3 : vector<8x8x9xf32> to vector<64x9xf32>
    %c0_3 = arith.constant 0 : index
    %c0_4 = arith.constant 0 : index
    %5 = vector.load %arg3[%c0_3, %c0_4] : memref<9x128xf32, #tpu.memory_space<vmem>>, vector<9x128xf32>
    %cst = arith.constant dense<0.000000e+00> : vector<64x128xf32>
    %6 = tpu.matmul %4, %5, %cst {dimension_numbers = #tpu.dot_dimension_numbers<[1], [0], [0], [1], [0, 0, 1, 1], [], []>} : vector<64x9xf32>, vector<9x128xf32>, vector<64x128xf32> -> vector<64x128xf32>
    %7 = vector.shape_cast %6 : vector<64x128xf32> to vector<8x8x128xf32>
    %c0_5 = arith.constant 0 : index
    %c0_6 = arith.constant 0 : index
    %c0_7 = arith.constant 0 : index
    %8 = vector.load %arg7[%c0_5, %c0_6, %c0_7] : memref<8x8x128xf32, #tpu.memory_space<vmem>>, vector<8x8x128xf32>
    tpu.vector_store %arg7[%c0_5, %c0_6, %c0_7], %7 {strides = array<i32>} : memref<8x8x128xf32, #tpu.memory_space<vmem>>, vector<8x8x128xf32>,
    %c0_8 = arith.constant 0 : index
    %c0_9 = arith.constant 0 : index
    %9 = vector.load %arg4[%c0_8, %c0_9] : memref<128x128xf32, #tpu.memory_space<vmem>>, vector<128x128xf32>
    %c0_10 = arith.constant 0 : index
    %c0_11 = arith.constant 0 : index
    %10 = vector.load %arg8[%c0_10, %c0_11] : memref<8x128xf32, #tpu.memory_space<vmem>>, vector<8x128xf32>
    %c0_i32_12 = arith.constant 0 : i32
    %11 = arith.index_cast %c0_i32_12 : i32 to index
    %c0_13 = arith.constant 0 : index
    %c0_14 = arith.constant 0 : index
    %12 = vector.load %arg7[%11, %c0_13, %c0_14] : memref<8x8x128xf32, #tpu.memory_space<vmem>>, vector<1x8x128xf32>
    %13 = vector.shape_cast %12 : vector<1x8x128xf32> to vector<8x128xf32>
    %cst_15 = arith.constant dense<0.000000e+00> : vector<8x128xf32>
    %14 = tpu.matmul %10, %9, %cst_15 {dimension_numbers = #tpu.dot_dimension_numbers<[1], [0], [0], [1], [0, 0, 1, 1], [], []>} : vector<8x128xf32>, vector<128x128xf32>, vector<8x128xf32> -> vector<8x128xf32>
    %15 = arith.addf %13, %14 : vector<8x128xf32>
    %16 = math.tanh %15 : vector<8x128xf32>
    %17 = arith.index_cast %c0_i32_12 : i32 to index
    %c0_16 = arith.constant 0 : index
    %c0_17 = arith.constant 0 : index
    %18 = vector.load %arg7[%17, %c0_16, %c0_17] : memref<8x8x128xf32, #tpu.memory_space<vmem>>, vector<1x8x128xf32>
    %19 = vector.shape_cast %18 : vector<1x8x128xf32> to vector<8x128xf32>
    %20 = vector.shape_cast %16 : vector<8x128xf32> to vector<1x8x128xf32>
    tpu.vector_store %arg7[%17, %c0_16, %c0_17], %20 {strides = array<i32>} : memref<8x8x128xf32, #tpu.memory_space<vmem>>, vector<1x8x128xf32>,
    %c1_i32 = arith.constant 1 : i32
    %21 = arith.index_cast %c1_i32 : i32 to index
    %c0_18 = arith.constant 0 : index
    %c0_19 = arith.constant 0 : index
    %22 = vector.load %arg7[%21, %c0_18, %c0_19] : memref<8x8x128xf32, #tpu.memory_space<vmem>>, vector<1x8x128xf32>
    %23 = vector.shape_cast %22 : vector<1x8x128xf32> to vector<8x128xf32>
    %cst_20 = arith.constant dense<0.000000e+00> : vector<8x128xf32>
    %24 = tpu.matmul %16, %9, %cst_20 {dimension_numbers = #tpu.dot_dimension_numbers<[1], [0], [0], [1], [0, 0, 1, 1], [], []>} : vector<8x128xf32>, vector<128x128xf32>, vector<8x128xf32> -> vector<8x128xf32>
    %25 = arith.addf %23, %24 : vector<8x128xf32>
    %26 = math.tanh %25 : vector<8x128xf32>
    %27 = arith.index_cast %c1_i32 : i32 to index
    %c0_21 = arith.constant 0 : index
    %c0_22 = arith.constant 0 : index
    %28 = vector.load %arg7[%27, %c0_21, %c0_22] : memref<8x8x128xf32, #tpu.memory_space<vmem>>, vector<1x8x128xf32>
    %29 = vector.shape_cast %28 : vector<1x8x128xf32> to vector<8x128xf32>
    %30 = vector.shape_cast %26 : vector<8x128xf32> to vector<1x8x128xf32>
    tpu.vector_store %arg7[%27, %c0_21, %c0_22], %30 {strides = array<i32>} : memref<8x8x128xf32, #tpu.memory_space<vmem>>, vector<1x8x128xf32>,
    %c2_i32 = arith.constant 2 : i32
    %31 = arith.index_cast %c2_i32 : i32 to index
    %c0_23 = arith.constant 0 : index
    %c0_24 = arith.constant 0 : index
    %32 = vector.load %arg7[%31, %c0_23, %c0_24] : memref<8x8x128xf32, #tpu.memory_space<vmem>>, vector<1x8x128xf32>
    %33 = vector.shape_cast %32 : vector<1x8x128xf32> to vector<8x128xf32>
    %cst_25 = arith.constant dense<0.000000e+00> : vector<8x128xf32>
    %34 = tpu.matmul %26, %9, %cst_25 {dimension_numbers = #tpu.dot_dimension_numbers<[1], [0], [0], [1], [0, 0, 1, 1], [], []>} : vector<8x128xf32>, vector<128x128xf32>, vector<8x128xf32> -> vector<8x128xf32>
    %35 = arith.addf %33, %34 : vector<8x128xf32>
    %36 = math.tanh %35 : vector<8x128xf32>
    %37 = arith.index_cast %c2_i32 : i32 to index
    %c0_26 = arith.constant 0 : index
    %c0_27 = arith.constant 0 : index
    %38 = vector.load %arg7[%37, %c0_26, %c0_27] : memref<8x8x128xf32, #tpu.memory_space<vmem>>, vector<1x8x128xf32>
    %39 = vector.shape_cast %38 : vector<1x8x128xf32> to vector<8x128xf32>
    %40 = vector.shape_cast %36 : vector<8x128xf32> to vector<1x8x128xf32>
    tpu.vector_store %arg7[%37, %c0_26, %c0_27], %40 {strides = array<i32>} : memref<8x8x128xf32, #tpu.memory_space<vmem>>, vector<1x8x128xf32>,
    %c3_i32 = arith.constant 3 : i32
    %41 = arith.index_cast %c3_i32 : i32 to index
    %c0_28 = arith.constant 0 : index
    %c0_29 = arith.constant 0 : index
    %42 = vector.load %arg7[%41, %c0_28, %c0_29] : memref<8x8x128xf32, #tpu.memory_space<vmem>>, vector<1x8x128xf32>
    %43 = vector.shape_cast %42 : vector<1x8x128xf32> to vector<8x128xf32>
    %cst_30 = arith.constant dense<0.000000e+00> : vector<8x128xf32>
    %44 = tpu.matmul %36, %9, %cst_30 {dimension_numbers = #tpu.dot_dimension_numbers<[1], [0], [0], [1], [0, 0, 1, 1], [], []>} : vector<8x128xf32>, vector<128x128xf32>, vector<8x128xf32> -> vector<8x128xf32>
    %45 = arith.addf %43, %44 : vector<8x128xf32>
    %46 = math.tanh %45 : vector<8x128xf32>
    %47 = arith.index_cast %c3_i32 : i32 to index
    %c0_31 = arith.constant 0 : index
    %c0_32 = arith.constant 0 : index
    %48 = vector.load %arg7[%47, %c0_31, %c0_32] : memref<8x8x128xf32, #tpu.memory_space<vmem>>, vector<1x8x128xf32>
    %49 = vector.shape_cast %48 : vector<1x8x128xf32> to vector<8x128xf32>
    %50 = vector.shape_cast %46 : vector<8x128xf32> to vector<1x8x128xf32>
    tpu.vector_store %arg7[%47, %c0_31, %c0_32], %50 {strides = array<i32>} : memref<8x8x128xf32, #tpu.memory_space<vmem>>, vector<1x8x128xf32>,
    %c4_i32 = arith.constant 4 : i32
    %51 = arith.index_cast %c4_i32 : i32 to index
    %c0_33 = arith.constant 0 : index
    %c0_34 = arith.constant 0 : index
    %52 = vector.load %arg7[%51, %c0_33, %c0_34] : memref<8x8x128xf32, #tpu.memory_space<vmem>>, vector<1x8x128xf32>
    %53 = vector.shape_cast %52 : vector<1x8x128xf32> to vector<8x128xf32>
    %cst_35 = arith.constant dense<0.000000e+00> : vector<8x128xf32>
    %54 = tpu.matmul %46, %9, %cst_35 {dimension_numbers = #tpu.dot_dimension_numbers<[1], [0], [0], [1], [0, 0, 1, 1], [], []>} : vector<8x128xf32>, vector<128x128xf32>, vector<8x128xf32> -> vector<8x128xf32>
    %55 = arith.addf %53, %54 : vector<8x128xf32>
    %56 = math.tanh %55 : vector<8x128xf32>
    %57 = arith.index_cast %c4_i32 : i32 to index
    %c0_36 = arith.constant 0 : index
    %c0_37 = arith.constant 0 : index
    %58 = vector.load %arg7[%57, %c0_36, %c0_37] : memref<8x8x128xf32, #tpu.memory_space<vmem>>, vector<1x8x128xf32>
    %59 = vector.shape_cast %58 : vector<1x8x128xf32> to vector<8x128xf32>
    %60 = vector.shape_cast %56 : vector<8x128xf32> to vector<1x8x128xf32>
    tpu.vector_store %arg7[%57, %c0_36, %c0_37], %60 {strides = array<i32>} : memref<8x8x128xf32, #tpu.memory_space<vmem>>, vector<1x8x128xf32>,
    %c5_i32 = arith.constant 5 : i32
    %61 = arith.index_cast %c5_i32 : i32 to index
    %c0_38 = arith.constant 0 : index
    %c0_39 = arith.constant 0 : index
    %62 = vector.load %arg7[%61, %c0_38, %c0_39] : memref<8x8x128xf32, #tpu.memory_space<vmem>>, vector<1x8x128xf32>
    %63 = vector.shape_cast %62 : vector<1x8x128xf32> to vector<8x128xf32>
    %cst_40 = arith.constant dense<0.000000e+00> : vector<8x128xf32>
    %64 = tpu.matmul %56, %9, %cst_40 {dimension_numbers = #tpu.dot_dimension_numbers<[1], [0], [0], [1], [0, 0, 1, 1], [], []>} : vector<8x128xf32>, vector<128x128xf32>, vector<8x128xf32> -> vector<8x128xf32>
    %65 = arith.addf %63, %64 : vector<8x128xf32>
    %66 = math.tanh %65 : vector<8x128xf32>
    %67 = arith.index_cast %c5_i32 : i32 to index
    %c0_41 = arith.constant 0 : index
    %c0_42 = arith.constant 0 : index
    %68 = vector.load %arg7[%67, %c0_41, %c0_42] : memref<8x8x128xf32, #tpu.memory_space<vmem>>, vector<1x8x128xf32>
    %69 = vector.shape_cast %68 : vector<1x8x128xf32> to vector<8x128xf32>
    %70 = vector.shape_cast %66 : vector<8x128xf32> to vector<1x8x128xf32>
    tpu.vector_store %arg7[%67, %c0_41, %c0_42], %70 {strides = array<i32>} : memref<8x8x128xf32, #tpu.memory_space<vmem>>, vector<1x8x128xf32>,
    %c6_i32 = arith.constant 6 : i32
    %71 = arith.index_cast %c6_i32 : i32 to index
    %c0_43 = arith.constant 0 : index
    %c0_44 = arith.constant 0 : index
    %72 = vector.load %arg7[%71, %c0_43, %c0_44] : memref<8x8x128xf32, #tpu.memory_space<vmem>>, vector<1x8x128xf32>
    %73 = vector.shape_cast %72 : vector<1x8x128xf32> to vector<8x128xf32>
    %cst_45 = arith.constant dense<0.000000e+00> : vector<8x128xf32>
    %74 = tpu.matmul %66, %9, %cst_45 {dimension_numbers = #tpu.dot_dimension_numbers<[1], [0], [0], [1], [0, 0, 1, 1], [], []>} : vector<8x128xf32>, vector<128x128xf32>, vector<8x128xf32> -> vector<8x128xf32>
    %75 = arith.addf %73, %74 : vector<8x128xf32>
    %76 = math.tanh %75 : vector<8x128xf32>
    %77 = arith.index_cast %c6_i32 : i32 to index
    %c0_46 = arith.constant 0 : index
    %c0_47 = arith.constant 0 : index
    %78 = vector.load %arg7[%77, %c0_46, %c0_47] : memref<8x8x128xf32, #tpu.memory_space<vmem>>, vector<1x8x128xf32>
    %79 = vector.shape_cast %78 : vector<1x8x128xf32> to vector<8x128xf32>
    %80 = vector.shape_cast %76 : vector<8x128xf32> to vector<1x8x128xf32>
    tpu.vector_store %arg7[%77, %c0_46, %c0_47], %80 {strides = array<i32>} : memref<8x8x128xf32, #tpu.memory_space<vmem>>, vector<1x8x128xf32>,
    %c7_i32 = arith.constant 7 : i32
    %81 = arith.index_cast %c7_i32 : i32 to index
    %c0_48 = arith.constant 0 : index
    %c0_49 = arith.constant 0 : index
    %82 = vector.load %arg7[%81, %c0_48, %c0_49] : memref<8x8x128xf32, #tpu.memory_space<vmem>>, vector<1x8x128xf32>
    %83 = vector.shape_cast %82 : vector<1x8x128xf32> to vector<8x128xf32>
    %cst_50 = arith.constant dense<0.000000e+00> : vector<8x128xf32>
    %84 = tpu.matmul %76, %9, %cst_50 {dimension_numbers = #tpu.dot_dimension_numbers<[1], [0], [0], [1], [0, 0, 1, 1], [], []>} : vector<8x128xf32>, vector<128x128xf32>, vector<8x128xf32> -> vector<8x128xf32>
    %85 = arith.addf %83, %84 : vector<8x128xf32>
    %86 = math.tanh %85 : vector<8x128xf32>
    %87 = arith.index_cast %c7_i32 : i32 to index
    %c0_51 = arith.constant 0 : index
    %c0_52 = arith.constant 0 : index
    %88 = vector.load %arg7[%87, %c0_51, %c0_52] : memref<8x8x128xf32, #tpu.memory_space<vmem>>, vector<1x8x128xf32>
    %89 = vector.shape_cast %88 : vector<1x8x128xf32> to vector<8x128xf32>
    %90 = vector.shape_cast %86 : vector<8x128xf32> to vector<1x8x128xf32>
    tpu.vector_store %arg7[%87, %c0_51, %c0_52], %90 {strides = array<i32>} : memref<8x8x128xf32, #tpu.memory_space<vmem>>, vector<1x8x128xf32>,
    %c8_i32 = arith.constant 8 : i32
    %c0_53 = arith.constant 0 : index
    %c0_54 = arith.constant 0 : index
    %91 = vector.load %arg8[%c0_53, %c0_54] : memref<8x128xf32, #tpu.memory_space<vmem>>, vector<8x128xf32>
    tpu.vector_store %arg8[%c0_53, %c0_54], %86 {strides = array<i32>} : memref<8x128xf32, #tpu.memory_space<vmem>>, vector<8x128xf32>,
    %c0_55 = arith.constant 0 : index
    %c0_56 = arith.constant 0 : index
    %92 = vector.load %arg5[%c0_55, %c0_56] : memref<128x128xf32, #tpu.memory_space<vmem>>, vector<128x128xf32>
    %c0_57 = arith.constant 0 : index
    %c0_58 = arith.constant 0 : index
    %c0_59 = arith.constant 0 : index
    %93 = vector.load %arg7[%c0_57, %c0_58, %c0_59] : memref<8x8x128xf32, #tpu.memory_space<vmem>>, vector<8x8x128xf32>
    %94 = vector.shape_cast %93 : vector<8x8x128xf32> to vector<64x128xf32>
    %cst_60 = arith.constant dense<0.000000e+00> : vector<64x128xf32>
    %95 = tpu.matmul %94, %92, %cst_60 {dimension_numbers = #tpu.dot_dimension_numbers<[1], [0], [0], [1], [0, 0, 1, 1], [], []>} : vector<64x128xf32>, vector<128x128xf32>, vector<64x128xf32> -> vector<64x128xf32>
    %96 = vector.shape_cast %95 : vector<64x128xf32> to vector<8x8x128xf32>
    %c0_61 = arith.constant 0 : index
    %c0_62 = arith.constant 0 : index
    %c0_63 = arith.constant 0 : index
    %97 = vector.load %arg6[%c0_61, %c0_62, %c0_63] : memref<8x8x128xf32, #tpu.memory_space<vmem>>, vector<8x8x128xf32>
    tpu.vector_store %arg6[%c0_61, %c0_62, %c0_63], %96 {strides = array<i32>} : memref<8x8x128xf32, #tpu.memory_space<vmem>>, vector<8x8x128xf32>,
    return
  }
  func.func @transform_0(%arg0: i32, %arg1: i32) -> (i32, i32, i32) {
    %c0_i32 = arith.constant 0 : i32
    %c0_i32_0 = arith.constant 0 : i32
    return %arg1, %arg0, %c0_i32 : i32, i32, i32
  }
  func.func @transform_1(%arg0: i32, %arg1: i32) -> (i32, i32) {
    %c0_i32 = arith.constant 0 : i32
    %c0_i32_0 = arith.constant 0 : i32
    %c0_i32_1 = arith.constant 0 : i32
    return %c0_i32, %c0_i32_0 : i32, i32
  }
  func.func @transform_2(%arg0: i32, %arg1: i32) -> (i32, i32) {
    %c0_i32 = arith.constant 0 : i32
    %c0_i32_0 = arith.constant 0 : i32
    %c0_i32_1 = arith.constant 0 : i32
    return %c0_i32, %c0_i32_0 : i32, i32
  }
  func.func @transform_3(%arg0: i32, %arg1: i32) -> (i32, i32) {
    %c0_i32 = arith.constant 0 : i32
    %c0_i32_0 = arith.constant 0 : i32
    %c0_i32_1 = arith.constant 0 : i32
    return %c0_i32, %c0_i32_0 : i32, i32
  }
  func.func @transform_4(%arg0: i32, %arg1: i32) -> (i32, i32, i32) {
    %c0_i32 = arith.constant 0 : i32
    %c0_i32_0 = arith.constant 0 : i32
    return %arg1, %arg0, %c0_i32 : i32, i32, i32
  }
}

</mosaic_0001>

<llo_original>
// kernel: rnn_model_forward.1
$region0: #{rnn_model_forward.1}
  #allocation0 [shape = 'u32[]', space=smem, size = 0x4, offset = 0x4, fixed_abs, tag = 'smem constant byte address 0x4 - core index']
  #allocation1 [shape = 'u32[144,128]{1,0:T(1,128)}', space=vmem, size = 0x12000, scoped, tag = 'internal scratch']
  #allocation2 [shape = 'f32[8,8,128]{2,1,0:T(8,128)}', space=vmem, size = 0x8000, scoped, tag = 'scratch operand']
  #allocation3 [shape = 'f32[8,128]{1,0:T(8,128)}', space=vmem, size = 0x1000, scoped, tag = 'scratch operand']
  %s0 = inlined_call_operand.vmem [shape: f32[8,8,9], index: 0, kind: input, shape index: {}]
  %s1 = inlined_call_operand.vmem [shape: f32[9,128], index: 1, kind: input, shape index: {}]
  %s2 = inlined_call_operand.vmem [shape: f32[128,128], index: 2, kind: input, shape index: {}]
  %s3 = inlined_call_operand.vmem [shape: f32[128,128], index: 3, kind: input, shape index: {}]
  %s4 = inlined_call_operand.vmem [shape: f32[8,8,128], index: 4, kind: output, shape index: {}]
  %s5 = sld [smem:[#allocation0]]
  $region30: #{rnn_model_forward.1} parent=0
    _
  %s7 = ssub.s32 1, %s5
  %s8 = scalar_select 0, %s7, %s5
  // Predicated region
  $region2: #{rnn_model_forward.1} parent=0 // pred_check
    _
  $region3: #{rnn_model_forward.1} parent=0 // pred_check_branch
    %10 = sbr.rel (0) target = $region5
  $region4: #{rnn_model_forward.1} parent=0 // pred_region
    _
  $region5: #{rnn_model_forward.1} parent=0 // pred_fallthru
    _
  // Predicated region
  $region6: #{rnn_model_forward.1} parent=0 // pred_check
    _
  $region7: #{rnn_model_forward.1} parent=0 // pred_check_branch
    %12 = sbr.rel (0) target = $region9
  $region8: #{rnn_model_forward.1} parent=0 // pred_region
    _
  $region9: #{rnn_model_forward.1} parent=0 // pred_fallthru
    _
  // Predicated region
  $region10: #{rnn_model_forward.1} parent=0 // pred_check
    _
  $region11: #{rnn_model_forward.1} parent=0 // pred_check_branch
    %14 = sbr.rel (0) target = $region13
  $region12: #{rnn_model_forward.1} parent=0 // pred_region
    _
  $region13: #{rnn_model_forward.1} parent=0 // pred_fallthru
    _
  // Predicated region
  $region14: #{rnn_model_forward.1} parent=0 // pred_check
    _
  $region15: #{rnn_model_forward.1} parent=0 // pred_check_branch
    %16 = sbr.rel (0) target = $region17
  $region16: #{rnn_model_forward.1} parent=0 // pred_region
    _
  $region17: #{rnn_model_forward.1} parent=0 // pred_fallthru
    _
  %p17 = scmp.eq.s32.totalorder 0, 0
  // Predicated region
  $region18: #{rnn_model_forward.1} parent=0 // pred_check
    %p18 = pneg %p17
  $region19: #{rnn_model_forward.1} parent=0 // pred_check_branch
    %20 = sbr.rel (%p18) target = $region21
  $region20: #{rnn_model_forward.1} parent=0 // pred_region
    %21 = vst [vmem:[#allocation3] sm:$0xff] 0.0
  $region21: #{rnn_model_forward.1} parent=0 // pred_fallthru
    _
  %v22 = vld [vmem:[%s0] sm:$0xff]
  %v23 = vld [vmem:[%s0 + $0x8] sm:$0xff]
  %v24 = vld [vmem:[%s0 + $0x10] sm:$0xff]
  %v25 = vld [vmem:[%s0 + $0x18] sm:$0xff]
  %v26 = vld [vmem:[%s0 + $0x20] sm:$0xff]
  %v27 = vld [vmem:[%s0 + $0x28] sm:$0xff]
  %v28 = vld [vmem:[%s0 + $0x30] sm:$0xff]
  %v29 = vld [vmem:[%s0 + $0x38] sm:$0xff]
  %v30 = vld [vmem:[%s1] sm:$0xff]
  %v31 = vld [vmem:[%s1 + $0x8] sm:$0x1]
  %vm32 = vcmask 72704
  %v34 = vsel %vm32, %v22, 0
  %v37 = vsel %vm32, %v23, 0
  %v40 = vsel %vm32, %v24, 0
  %v43 = vsel %vm32, %v25, 0
  %v46 = vsel %vm32, %v26, 0
  %v49 = vsel %vm32, %v27, 0
  %v52 = vsel %vm32, %v28, 0
  %v55 = vsel %vm32, %v29, 0
  %vm57 = vcmask 1040384
  %v59 = vsel %vm57, %v31, 0
  %61 = vmatprep.subr.mxu0 0.0
  %62 = vmatpush1.msra.mxu0 %v30
  %63 = vmatprep.subr.mxu0 0.0
  %64 = vmatpush1.msra.mxu0 %v59
  %65 = vmatprep.subr.mxu0 0.0
  %66 = vmatpush1.msra.mxu0 0.0
  %67 = vmatprep.subr.mxu0 0.0
  %68 = vmatpush1.msra.mxu0 0.0
  %69 = vmatprep.subr.mxu0 0.0
  %70 = vmatpush1.msra.mxu0 0.0
  %71 = vmatprep.subr.mxu0 0.0
  %72 = vmatpush1.msra.mxu0 0.0
  %73 = vmatprep.subr.mxu0 0.0
  %74 = vmatpush1.msra.mxu0 0.0
  %75 = vmatprep.subr.mxu0 0.0
  %76 = vmatpush1.msra.mxu0 0.0
  %77 = vmatprep.subr.mxu0 0.0
  %78 = vmatpush1.msra.mxu0 0.0
  %79 = vmatprep.subr.mxu0 0.0
  %80 = vmatpush1.msra.mxu0 0.0
  %81 = vmatprep.subr.mxu0 0.0
  %82 = vmatpush1.msra.mxu0 0.0
  %83 = vmatprep.subr.mxu0 0.0
  %84 = vmatpush1.msra.mxu0 0.0
  %85 = vmatprep.subr.mxu0 0.0
  %86 = vmatpush1.msra.mxu0 0.0
  %87 = vmatprep.subr.mxu0 0.0
  %88 = vmatpush1.msra.mxu0 0.0
  %89 = vmatprep.subr.mxu0 0.0
  %90 = vmatpush1.msra.mxu0 0.0
  %91 = vmatprep.subr.mxu0 0.0
  %92 = vmatpush1.msra.mxu0 0.0
  %93 = vmatprep.subr.mxu0 0.0
  %94 = vmatpush1.msra.mxu0 0.0
  %95 = vmatprep.subr.mxu0 0.0
  %96 = vmatpush1.msra.mxu0 0.0
  %97 = vmatprep.subr.mxu0 0.0
  %98 = vmatpush1.msra.mxu0 0.0
  %99 = vmatprep.subr.mxu0 0.0
  %100 = vmatpush1.msra.mxu0 0.0
  %101 = vmatprep.subr.mxu0 0.0
  %102 = vmatpush1.msra.mxu0 0.0
  %103 = vmatprep.subr.mxu0 0.0
  %104 = vmatpush1.msra.mxu0 0.0
  %105 = vmatprep.subr.mxu0 0.0
  %106 = vmatpush1.msra.mxu0 0.0
  %107 = vmatprep.subr.mxu0 0.0
  %108 = vmatpush1.msra.mxu0 0.0
  %109 = vmatprep.subr.mxu0 0.0
  %110 = vmatpush1.msra.mxu0 0.0
  %111 = vmatprep.subr.mxu0 0.0
  %112 = vmatpush1.msra.mxu0 0.0
  %113 = vmatprep.subr.mxu0 0.0
  %114 = vmatpush1.msra.mxu0 0.0
  %115 = vmatprep.subr.mxu0 0.0
  %116 = vmatpush1.msra.mxu0 0.0
  %117 = vmatprep.subr.mxu0 0.0
  %118 = vmatpush1.msra.mxu0 0.0
  %119 = vmatprep.subr.mxu0 0.0
  %120 = vmatpush1.msra.mxu0 0.0
  %121 = vmatprep.subr.mxu0 0.0
  %122 = vmatpush1.msra.mxu0 0.0
  %123 = vmatprep.subr.mxu0 0.0
  %124 = vmatpush1.msra.mxu0 0.0
  %125 = vmatprep.mubr.f32.mxu0 0.0
  %126 = vmatmul.mubr.f32.gmra.mrb[0].mxu0 %v34
  %v127 = vpop.f32.mrb[0].mxu0
  %v128 = vadd.f32 0.0, %v127
  %v129 = vpop.f32.mrb[0].mxu0
  %130 = vmatprep.mubr.f32.mxu0 0.0
  %131 = vmatmul.mubr.f32.gmra.mrb[0].mxu0 %v37
  %v132 = vpop.f32.mrb[0].mxu0
  %v133 = vadd.f32 0.0, %v132
  %v134 = vpop.f32.mrb[0].mxu0
  %135 = vmatprep.mubr.f32.mxu0 0.0
  %136 = vmatmul.mubr.f32.gmra.mrb[0].mxu0 %v40
  %v137 = vpop.f32.mrb[0].mxu0
  %v138 = vadd.f32 0.0, %v137
  %v139 = vpop.f32.mrb[0].mxu0
  %140 = vmatprep.mubr.f32.mxu0 0.0
  %141 = vmatmul.mubr.f32.gmra.mrb[0].mxu0 %v43
  %v142 = vpop.f32.mrb[0].mxu0
  %v143 = vadd.f32 0.0, %v142
  %v144 = vpop.f32.mrb[0].mxu0
  %145 = vmatprep.mubr.f32.mxu0 0.0
  %146 = vmatmul.mubr.f32.gmra.mrb[0].mxu0 %v46
  %v147 = vpop.f32.mrb[0].mxu0
  %v148 = vadd.f32 0.0, %v147
  %v149 = vpop.f32.mrb[0].mxu0
  %150 = vmatprep.mubr.f32.mxu0 0.0
  %151 = vmatmul.mubr.f32.gmra.mrb[0].mxu0 %v49
  %v152 = vpop.f32.mrb[0].mxu0
  %v153 = vadd.f32 0.0, %v152
  %v154 = vpop.f32.mrb[0].mxu0
  %155 = vmatprep.mubr.f32.mxu0 0.0
  %156 = vmatmul.mubr.f32.gmra.mrb[0].mxu0 %v52
  %v157 = vpop.f32.mrb[0].mxu0
  %v158 = vadd.f32 0.0, %v157
  %v159 = vpop.f32.mrb[0].mxu0
  %160 = vmatprep.mubr.f32.mxu0 0.0
  %161 = vmatmul.mubr.f32.gmra.mrb[0].mxu0 %v55
  %v162 = vpop.f32.mrb[0].mxu0
  %v163 = vadd.f32 0.0, %v162
  %v164 = vpop.f32.mrb[0].mxu0
  %165 = vdwg.mxu0
  %166 = vst [vmem:[#allocation2] sm:$0xff] %v128
  %167 = vst [vmem:[#allocation2 + $0x8] sm:$0xff] %v133
  %168 = vst [vmem:[#allocation2 + $0x10] sm:$0xff] %v138
  %169 = vst [vmem:[#allocation2 + $0x18] sm:$0xff] %v143
  %170 = vst [vmem:[#allocation2 + $0x20] sm:$0xff] %v148
  %171 = vst [vmem:[#allocation2 + $0x28] sm:$0xff] %v153
  %172 = vst [vmem:[#allocation2 + $0x30] sm:$0xff] %v158
  %173 = vst [vmem:[#allocation2 + $0x38] sm:$0xff] %v163
  %v174 = vld [vmem:[%s2] sm:$0xff]
  %v175 = vld [vmem:[%s2 + $0x8] sm:$0xff]
  %v176 = vld [vmem:[%s2 + $0x10] sm:$0xff]
  %v177 = vld [vmem:[%s2 + $0x18] sm:$0xff]
  %v178 = vld [vmem:[%s2 + $0x20] sm:$0xff]
  %v179 = vld [vmem:[%s2 + $0x28] sm:$0xff]
  %v180 = vld [vmem:[%s2 + $0x30] sm:$0xff]
  %v181 = vld [vmem:[%s2 + $0x38] sm:$0xff]
  %v182 = vld [vmem:[%s2 + $0x40] sm:$0xff]
  %v183 = vld [vmem:[%s2 + $0x48] sm:$0xff]
  %v184 = vld [vmem:[%s2 + $0x50] sm:$0xff]
  %v185 = vld [vmem:[%s2 + $0x58] sm:$0xff]
  %v186 = vld [vmem:[%s2 + $0x60] sm:$0xff]
  %v187 = vld [vmem:[%s2 + $0x68] sm:$0xff]
  %v188 = vld [vmem:[%s2 + $0x70] sm:$0xff]
  %v189 = vld [vmem:[%s2 + $0x78] sm:$0xff]
  %v190 = vld [vmem:[#allocation3] sm:$0xff]
  %v191 = vld [vmem:[#allocation2] sm:$0xff]
  %192 = vmatprep.subr.mxu0 0.0
  %193 = vmatpush1.msra.mxu0 %v174
  %194 = vmatprep.subr.mxu0 0.0
  %195 = vmatpush1.msra.mxu0 %v175
  %196 = vmatprep.subr.mxu0 0.0
  %197 = vmatpush1.msra.mxu0 %v176
  %198 = vmatprep.subr.mxu0 0.0
  %199 = vmatpush1.msra.mxu0 %v177
  %200 = vmatprep.subr.mxu0 0.0
  %201 = vmatpush1.msra.mxu0 %v178
  %202 = vmatprep.subr.mxu0 0.0
  %203 = vmatpush1.msra.mxu0 %v179
  %204 = vmatprep.subr.mxu0 0.0
  %205 = vmatpush1.msra.mxu0 %v180
  %206 = vmatprep.subr.mxu0 0.0
  %207 = vmatpush1.msra.mxu0 %v181
  %208 = vmatprep.subr.mxu0 0.0
  %209 = vmatpush1.msra.mxu0 %v182
  %210 = vmatprep.subr.mxu0 0.0
  %211 = vmatpush1.msra.mxu0 %v183
  %212 = vmatprep.subr.mxu0 0.0
  %213 = vmatpush1.msra.mxu0 %v184
  %214 = vmatprep.subr.mxu0 0.0
  %215 = vmatpush1.msra.mxu0 %v185
  %216 = vmatprep.subr.mxu0 0.0
  %217 = vmatpush1.msra.mxu0 %v186
  %218 = vmatprep.subr.mxu0 0.0
  %219 = vmatpush1.msra.mxu0 %v187
  %220 = vmatprep.subr.mxu0 0.0
  %221 = vmatpush1.msra.mxu0 %v188
  %222 = vmatprep.subr.mxu0 0.0
  %223 = vmatpush1.msra.mxu0 %v189
  %224 = vmatprep.subr.mxu0 0.0
  %225 = vmatpush1.msra.mxu0 0.0
  %226 = vmatprep.subr.mxu0 0.0
  %227 = vmatpush1.msra.mxu0 0.0
  %228 = vmatprep.subr.mxu0 0.0
  %229 = vmatpush1.msra.mxu0 0.0
  %230 = vmatprep.subr.mxu0 0.0
  %231 = vmatpush1.msra.mxu0 0.0
  %232 = vmatprep.subr.mxu0 0.0
  %233 = vmatpush1.msra.mxu0 0.0
  %234 = vmatprep.subr.mxu0 0.0
  %235 = vmatpush1.msra.mxu0 0.0
  %236 = vmatprep.subr.mxu0 0.0
  %237 = vmatpush1.msra.mxu0 0.0
  %238 = vmatprep.subr.mxu0 0.0
  %239 = vmatpush1.msra.mxu0 0.0
  %240 = vmatprep.subr.mxu0 0.0
  %241 = vmatpush1.msra.mxu0 0.0
  %242 = vmatprep.subr.mxu0 0.0
  %243 = vmatpush1.msra.mxu0 0.0
  %244 = vmatprep.subr.mxu0 0.0
  %245 = vmatpush1.msra.mxu0 0.0
  %246 = vmatprep.subr.mxu0 0.0
  %247 = vmatpush1.msra.mxu0 0.0
  %248 = vmatprep.subr.mxu0 0.0
  %249 = vmatpush1.msra.mxu0 0.0
  %250 = vmatprep.subr.mxu0 0.0
  %251 = vmatpush1.msra.mxu0 0.0
  %252 = vmatprep.subr.mxu0 0.0
  %253 = vmatpush1.msra.mxu0 0.0
  %254 = vmatprep.subr.mxu0 0.0
  %255 = vmatpush1.msra.mxu0 0.0
  %256 = vmatprep.mubr.f32.mxu0 0.0
  %257 = vmatmul.mubr.f32.gmra.mrb[0].mxu0 %v190
  %v258 = vpop.f32.mrb[0].mxu0
  %v259 = vadd.f32 0.0, %v258
  %v260 = vpop.f32.mrb[0].mxu0
  %261 = vdwg.mxu0
  %v262 = vadd.f32 %v191, %v259
  %v263 = vtanh.pop %v262
  %264 = vst [vmem:[#allocation2] sm:$0xff] %v263
  %s265 = scalar_lea.vmem [#allocation2], 8
  %v266 = vld [vmem:[%s265] sm:$0xff]
  %267 = vmatprep.subr.mxu0 0.0
  %268 = vmatpush1.msra.mxu0 %v174
  %269 = vmatprep.subr.mxu0 0.0
  %270 = vmatpush1.msra.mxu0 %v175
  %271 = vmatprep.subr.mxu0 0.0
  %272 = vmatpush1.msra.mxu0 %v176
  %273 = vmatprep.subr.mxu0 0.0
  %274 = vmatpush1.msra.mxu0 %v177
  %275 = vmatprep.subr.mxu0 0.0
  %276 = vmatpush1.msra.mxu0 %v178
  %277 = vmatprep.subr.mxu0 0.0
  %278 = vmatpush1.msra.mxu0 %v179
  %279 = vmatprep.subr.mxu0 0.0
  %280 = vmatpush1.msra.mxu0 %v180
  %281 = vmatprep.subr.mxu0 0.0
  %282 = vmatpush1.msra.mxu0 %v181
  %283 = vmatprep.subr.mxu0 0.0
  %284 = vmatpush1.msra.mxu0 %v182
  %285 = vmatprep.subr.mxu0 0.0
  %286 = vmatpush1.msra.mxu0 %v183
  %287 = vmatprep.subr.mxu0 0.0
  %288 = vmatpush1.msra.mxu0 %v184
  %289 = vmatprep.subr.mxu0 0.0
  %290 = vmatpush1.msra.mxu0 %v185
  %291 = vmatprep.subr.mxu0 0.0
  %292 = vmatpush1.msra.mxu0 %v186
  %293 = vmatprep.subr.mxu0 0.0
  %294 = vmatpush1.msra.mxu0 %v187
  %295 = vmatprep.subr.mxu0 0.0
  %296 = vmatpush1.msra.mxu0 %v188
  %297 = vmatprep.subr.mxu0 0.0
  %298 = vmatpush1.msra.mxu0 %v189
  %299 = vmatprep.subr.mxu0 0.0
  %300 = vmatpush1.msra.mxu0 0.0
  %301 = vmatprep.subr.mxu0 0.0
  %302 = vmatpush1.msra.mxu0 0.0
  %303 = vmatprep.subr.mxu0 0.0
  %304 = vmatpush1.msra.mxu0 0.0
  %305 = vmatprep.subr.mxu0 0.0
  %306 = vmatpush1.msra.mxu0 0.0
  %307 = vmatprep.subr.mxu0 0.0
  %308 = vmatpush1.msra.mxu0 0.0
  %309 = vmatprep.subr.mxu0 0.0
  %310 = vmatpush1.msra.mxu0 0.0
  %311 = vmatprep.subr.mxu0 0.0
  %312 = vmatpush1.msra.mxu0 0.0
  %313 = vmatprep.subr.mxu0 0.0
  %314 = vmatpush1.msra.mxu0 0.0
  %315 = vmatprep.subr.mxu0 0.0
  %316 = vmatpush1.msra.mxu0 0.0
  %317 = vmatprep.subr.mxu0 0.0
  %318 = vmatpush1.msra.mxu0 0.0
  %319 = vmatprep.subr.mxu0 0.0
  %320 = vmatpush1.msra.mxu0 0.0
  %321 = vmatprep.subr.mxu0 0.0
  %322 = vmatpush1.msra.mxu0 0.0
  %323 = vmatprep.subr.mxu0 0.0
  %324 = vmatpush1.msra.mxu0 0.0
  %325 = vmatprep.subr.mxu0 0.0
  %326 = vmatpush1.msra.mxu0 0.0
  %327 = vmatprep.subr.mxu0 0.0
  %328 = vmatpush1.msra.mxu0 0.0
  %329 = vmatprep.subr.mxu0 0.0
  %330 = vmatpush1.msra.mxu0 0.0
  %331 = vmatprep.mubr.f32.mxu0 0.0
  %332 = vmatmul.mubr.f32.gmra.mrb[0].mxu0 %v263
  %v333 = vpop.f32.mrb[0].mxu0
  %v334 = vadd.f32 0.0, %v333
  %v335 = vpop.f32.mrb[0].mxu0
  %336 = vdwg.mxu0
  %v337 = vadd.f32 %v266, %v334
  %v338 = vtanh.pop %v337
  %339 = vst [vmem:[%s265] sm:$0xff] %v338
  %s340 = scalar_lea.vmem [#allocation2], 16
  %v341 = vld [vmem:[%s340] sm:$0xff]
  %342 = vmatprep.subr.mxu0 0.0
  %343 = vmatpush1.msra.mxu0 %v174
  %344 = vmatprep.subr.mxu0 0.0
  %345 = vmatpush1.msra.mxu0 %v175
  %346 = vmatprep.subr.mxu0 0.0
  %347 = vmatpush1.msra.mxu0 %v176
  %348 = vmatprep.subr.mxu0 0.0
  %349 = vmatpush1.msra.mxu0 %v177
  %350 = vmatprep.subr.mxu0 0.0
  %351 = vmatpush1.msra.mxu0 %v178
  %352 = vmatprep.subr.mxu0 0.0
  %353 = vmatpush1.msra.mxu0 %v179
  %354 = vmatprep.subr.mxu0 0.0
  %355 = vmatpush1.msra.mxu0 %v180
  %356 = vmatprep.subr.mxu0 0.0
  %357 = vmatpush1.msra.mxu0 %v181
  %358 = vmatprep.subr.mxu0 0.0
  %359 = vmatpush1.msra.mxu0 %v182
  %360 = vmatprep.subr.mxu0 0.0
  %361 = vmatpush1.msra.mxu0 %v183
  %362 = vmatprep.subr.mxu0 0.0
  %363 = vmatpush1.msra.mxu0 %v184
  %364 = vmatprep.subr.mxu0 0.0
  %365 = vmatpush1.msra.mxu0 %v185
  %366 = vmatprep.subr.mxu0 0.0
  %367 = vmatpush1.msra.mxu0 %v186
  %368 = vmatprep.subr.mxu0 0.0
  %369 = vmatpush1.msra.mxu0 %v187
  %370 = vmatprep.subr.mxu0 0.0
  %371 = vmatpush1.msra.mxu0 %v188
  %372 = vmatprep.subr.mxu0 0.0
  %373 = vmatpush1.msra.mxu0 %v189
  %374 = vmatprep.subr.mxu0 0.0
  %375 = vmatpush1.msra.mxu0 0.0
  %376 = vmatprep.subr.mxu0 0.0
  %377 = vmatpush1.msra.mxu0 0.0
  %378 = vmatprep.subr.mxu0 0.0
  %379 = vmatpush1.msra.mxu0 0.0
  %380 = vmatprep.subr.mxu0 0.0
  %381 = vmatpush1.msra.mxu0 0.0
  %382 = vmatprep.subr.mxu0 0.0
  %383 = vmatpush1.msra.mxu0 0.0
  %384 = vmatprep.subr.mxu0 0.0
  %385 = vmatpush1.msra.mxu0 0.0
  %386 = vmatprep.subr.mxu0 0.0
  %387 = vmatpush1.msra.mxu0 0.0
  %388 = vmatprep.subr.mxu0 0.0
  %389 = vmatpush1.msra.mxu0 0.0
  %390 = vmatprep.subr.mxu0 0.0
  %391 = vmatpush1.msra.mxu0 0.0
  %392 = vmatprep.subr.mxu0 0.0
  %393 = vmatpush1.msra.mxu0 0.0
  %394 = vmatprep.subr.mxu0 0.0
  %395 = vmatpush1.msra.mxu0 0.0
  %396 = vmatprep.subr.mxu0 0.0
  %397 = vmatpush1.msra.mxu0 0.0
  %398 = vmatprep.subr.mxu0 0.0
  %399 = vmatpush1.msra.mxu0 0.0
  %400 = vmatprep.subr.mxu0 0.0
  %401 = vmatpush1.msra.mxu0 0.0
  %402 = vmatprep.subr.mxu0 0.0
  %403 = vmatpush1.msra.mxu0 0.0
  %404 = vmatprep.subr.mxu0 0.0
  %405 = vmatpush1.msra.mxu0 0.0
  %406 = vmatprep.mubr.f32.mxu0 0.0
  %407 = vmatmul.mubr.f32.gmra.mrb[0].mxu0 %v338
  %v408 = vpop.f32.mrb[0].mxu0
  %v409 = vadd.f32 0.0, %v408
  %v410 = vpop.f32.mrb[0].mxu0
  %411 = vdwg.mxu0
  %v412 = vadd.f32 %v341, %v409
  %v413 = vtanh.pop %v412
  %414 = vst [vmem:[%s340] sm:$0xff] %v413
  %s415 = scalar_lea.vmem [#allocation2], 24
  %v416 = vld [vmem:[%s415] sm:$0xff]
  %417 = vmatprep.subr.mxu0 0.0
  %418 = vmatpush1.msra.mxu0 %v174
  %419 = vmatprep.subr.mxu0 0.0
  %420 = vmatpush1.msra.mxu0 %v175
  %421 = vmatprep.subr.mxu0 0.0
  %422 = vmatpush1.msra.mxu0 %v176
  %423 = vmatprep.subr.mxu0 0.0
  %424 = vmatpush1.msra.mxu0 %v177
  %425 = vmatprep.subr.mxu0 0.0
  %426 = vmatpush1.msra.mxu0 %v178
  %427 = vmatprep.subr.mxu0 0.0
  %428 = vmatpush1.msra.mxu0 %v179
  %429 = vmatprep.subr.mxu0 0.0
  %430 = vmatpush1.msra.mxu0 %v180
  %431 = vmatprep.subr.mxu0 0.0
  %432 = vmatpush1.msra.mxu0 %v181
  %433 = vmatprep.subr.mxu0 0.0
  %434 = vmatpush1.msra.mxu0 %v182
  %435 = vmatprep.subr.mxu0 0.0
  %436 = vmatpush1.msra.mxu0 %v183
  %437 = vmatprep.subr.mxu0 0.0
  %438 = vmatpush1.msra.mxu0 %v184
  %439 = vmatprep.subr.mxu0 0.0
  %440 = vmatpush1.msra.mxu0 %v185
  %441 = vmatprep.subr.mxu0 0.0
  %442 = vmatpush1.msra.mxu0 %v186
  %443 = vmatprep.subr.mxu0 0.0
  %444 = vmatpush1.msra.mxu0 %v187
  %445 = vmatprep.subr.mxu0 0.0
  %446 = vmatpush1.msra.mxu0 %v188
  %447 = vmatprep.subr.mxu0 0.0
  %448 = vmatpush1.msra.mxu0 %v189
  %449 = vmatprep.subr.mxu0 0.0
  %450 = vmatpush1.msra.mxu0 0.0
  %451 = vmatprep.subr.mxu0 0.0
  %452 = vmatpush1.msra.mxu0 0.0
  %453 = vmatprep.subr.mxu0 0.0
  %454 = vmatpush1.msra.mxu0 0.0
  %455 = vmatprep.subr.mxu0 0.0
  %456 = vmatpush1.msra.mxu0 0.0
  %457 = vmatprep.subr.mxu0 0.0
  %458 = vmatpush1.msra.mxu0 0.0
  %459 = vmatprep.subr.mxu0 0.0
  %460 = vmatpush1.msra.mxu0 0.0
  %461 = vmatprep.subr.mxu0 0.0
  %462 = vmatpush1.msra.mxu0 0.0
  %463 = vmatprep.subr.mxu0 0.0
  %464 = vmatpush1.msra.mxu0 0.0
  %465 = vmatprep.subr.mxu0 0.0
  %466 = vmatpush1.msra.mxu0 0.0
  %467 = vmatprep.subr.mxu0 0.0
  %468 = vmatpush1.msra.mxu0 0.0
  %469 = vmatprep.subr.mxu0 0.0
  %470 = vmatpush1.msra.mxu0 0.0
  %471 = vmatprep.subr.mxu0 0.0
  %472 = vmatpush1.msra.mxu0 0.0
  %473 = vmatprep.subr.mxu0 0.0
  %474 = vmatpush1.msra.mxu0 0.0
  %475 = vmatprep.subr.mxu0 0.0
  %476 = vmatpush1.msra.mxu0 0.0
  %477 = vmatprep.subr.mxu0 0.0
  %478 = vmatpush1.msra.mxu0 0.0
  %479 = vmatprep.subr.mxu0 0.0
  %480 = vmatpush1.msra.mxu0 0.0
  %481 = vmatprep.mubr.f32.mxu0 0.0
  %482 = vmatmul.mubr.f32.gmra.mrb[0].mxu0 %v413
  %v483 = vpop.f32.mrb[0].mxu0
  %v484 = vadd.f32 0.0, %v483
  %v485 = vpop.f32.mrb[0].mxu0
  %486 = vdwg.mxu0
  %v487 = vadd.f32 %v416, %v484
  %v488 = vtanh.pop %v487
  %489 = vst [vmem:[%s415] sm:$0xff] %v488
  %s490 = scalar_lea.vmem [#allocation2], 32
  %v491 = vld [vmem:[%s490] sm:$0xff]
  %492 = vmatprep.subr.mxu0 0.0
  %493 = vmatpush1.msra.mxu0 %v174
  %494 = vmatprep.subr.mxu0 0.0
  %495 = vmatpush1.msra.mxu0 %v175
  %496 = vmatprep.subr.mxu0 0.0
  %497 = vmatpush1.msra.mxu0 %v176
  %498 = vmatprep.subr.mxu0 0.0
  %499 = vmatpush1.msra.mxu0 %v177
  %500 = vmatprep.subr.mxu0 0.0
  %501 = vmatpush1.msra.mxu0 %v178
  %502 = vmatprep.subr.mxu0 0.0
  %503 = vmatpush1.msra.mxu0 %v179
  %504 = vmatprep.subr.mxu0 0.0
  %505 = vmatpush1.msra.mxu0 %v180
  %506 = vmatprep.subr.mxu0 0.0
  %507 = vmatpush1.msra.mxu0 %v181
  %508 = vmatprep.subr.mxu0 0.0
  %509 = vmatpush1.msra.mxu0 %v182
  %510 = vmatprep.subr.mxu0 0.0
  %511 = vmatpush1.msra.mxu0 %v183
  %512 = vmatprep.subr.mxu0 0.0
  %513 = vmatpush1.msra.mxu0 %v184
  %514 = vmatprep.subr.mxu0 0.0
  %515 = vmatpush1.msra.mxu0 %v185
  %516 = vmatprep.subr.mxu0 0.0
  %517 = vmatpush1.msra.mxu0 %v186
  %518 = vmatprep.subr.mxu0 0.0
  %519 = vmatpush1.msra.mxu0 %v187
  %520 = vmatprep.subr.mxu0 0.0
  %521 = vmatpush1.msra.mxu0 %v188
  %522 = vmatprep.subr.mxu0 0.0
  %523 = vmatpush1.msra.mxu0 %v189
  %524 = vmatprep.subr.mxu0 0.0
  %525 = vmatpush1.msra.mxu0 0.0
  %526 = vmatprep.subr.mxu0 0.0
  %527 = vmatpush1.msra.mxu0 0.0
  %528 = vmatprep.subr.mxu0 0.0
  %529 = vmatpush1.msra.mxu0 0.0
  %530 = vmatprep.subr.mxu0 0.0
  %531 = vmatpush1.msra.mxu0 0.0
  %532 = vmatprep.subr.mxu0 0.0
  %533 = vmatpush1.msra.mxu0 0.0
  %534 = vmatprep.subr.mxu0 0.0
  %535 = vmatpush1.msra.mxu0 0.0
  %536 = vmatprep.subr.mxu0 0.0
  %537 = vmatpush1.msra.mxu0 0.0
  %538 = vmatprep.subr.mxu0 0.0
  %539 = vmatpush1.msra.mxu0 0.0
  %540 = vmatprep.subr.mxu0 0.0
  %541 = vmatpush1.msra.mxu0 0.0
  %542 = vmatprep.subr.mxu0 0.0
  %543 = vmatpush1.msra.mxu0 0.0
  %544 = vmatprep.subr.mxu0 0.0
  %545 = vmatpush1.msra.mxu0 0.0
  %546 = vmatprep.subr.mxu0 0.0
  %547 = vmatpush1.msra.mxu0 0.0
  %548 = vmatprep.subr.mxu0 0.0
  %549 = vmatpush1.msra.mxu0 0.0
  %550 = vmatprep.subr.mxu0 0.0
  %551 = vmatpush1.msra.mxu0 0.0
  %552 = vmatprep.subr.mxu0 0.0
  %553 = vmatpush1.msra.mxu0 0.0
  %554 = vmatprep.subr.mxu0 0.0
  %555 = vmatpush1.msra.mxu0 0.0
  %556 = vmatprep.mubr.f32.mxu0 0.0
  %557 = vmatmul.mubr.f32.gmra.mrb[0].mxu0 %v488
  %v558 = vpop.f32.mrb[0].mxu0
  %v559 = vadd.f32 0.0, %v558
  %v560 = vpop.f32.mrb[0].mxu0
  %561 = vdwg.mxu0
  %v562 = vadd.f32 %v491, %v559
  %v563 = vtanh.pop %v562
  %564 = vst [vmem:[%s490] sm:$0xff] %v563
  %s565 = scalar_lea.vmem [#allocation2], 40
  %v566 = vld [vmem:[%s565] sm:$0xff]
  %567 = vmatprep.subr.mxu0 0.0
  %568 = vmatpush1.msra.mxu0 %v174
  %569 = vmatprep.subr.mxu0 0.0
  %570 = vmatpush1.msra.mxu0 %v175
  %571 = vmatprep.subr.mxu0 0.0
  %572 = vmatpush1.msra.mxu0 %v176
  %573 = vmatprep.subr.mxu0 0.0
  %574 = vmatpush1.msra.mxu0 %v177
  %575 = vmatprep.subr.mxu0 0.0
  %576 = vmatpush1.msra.mxu0 %v178
  %577 = vmatprep.subr.mxu0 0.0
  %578 = vmatpush1.msra.mxu0 %v179
  %579 = vmatprep.subr.mxu0 0.0
  %580 = vmatpush1.msra.mxu0 %v180
  %581 = vmatprep.subr.mxu0 0.0
  %582 = vmatpush1.msra.mxu0 %v181
  %583 = vmatprep.subr.mxu0 0.0
  %584 = vmatpush1.msra.mxu0 %v182
  %585 = vmatprep.subr.mxu0 0.0
  %586 = vmatpush1.msra.mxu0 %v183
  %587 = vmatprep.subr.mxu0 0.0
  %588 = vmatpush1.msra.mxu0 %v184
  %589 = vmatprep.subr.mxu0 0.0
  %590 = vmatpush1.msra.mxu0 %v185
  %591 = vmatprep.subr.mxu0 0.0
  %592 = vmatpush1.msra.mxu0 %v186
  %593 = vmatprep.subr.mxu0 0.0
  %594 = vmatpush1.msra.mxu0 %v187
  %595 = vmatprep.subr.mxu0 0.0
  %596 = vmatpush1.msra.mxu0 %v188
  %597 = vmatprep.subr.mxu0 0.0
  %598 = vmatpush1.msra.mxu0 %v189
  %599 = vmatprep.subr.mxu0 0.0
  %600 = vmatpush1.msra.mxu0 0.0
  %601 = vmatprep.subr.mxu0 0.0
  %602 = vmatpush1.msra.mxu0 0.0
  %603 = vmatprep.subr.mxu0 0.0
  %604 = vmatpush1.msra.mxu0 0.0
  %605 = vmatprep.subr.mxu0 0.0
  %606 = vmatpush1.msra.mxu0 0.0
  %607 = vmatprep.subr.mxu0 0.0
  %608 = vmatpush1.msra.mxu0 0.0
  %609 = vmatprep.subr.mxu0 0.0
  %610 = vmatpush1.msra.mxu0 0.0
  %611 = vmatprep.subr.mxu0 0.0
  %612 = vmatpush1.msra.mxu0 0.0
  %613 = vmatprep.subr.mxu0 0.0
  %614 = vmatpush1.msra.mxu0 0.0
  %615 = vmatprep.subr.mxu0 0.0
  %616 = vmatpush1.msra.mxu0 0.0
  %617 = vmatprep.subr.mxu0 0.0
  %618 = vmatpush1.msra.mxu0 0.0
  %619 = vmatprep.subr.mxu0 0.0
  %620 = vmatpush1.msra.mxu0 0.0
  %621 = vmatprep.subr.mxu0 0.0
  %622 = vmatpush1.msra.mxu0 0.0
  %623 = vmatprep.subr.mxu0 0.0
  %624 = vmatpush1.msra.mxu0 0.0
  %625 = vmatprep.subr.mxu0 0.0
  %626 = vmatpush1.msra.mxu0 0.0
  %627 = vmatprep.subr.mxu0 0.0
  %628 = vmatpush1.msra.mxu0 0.0
  %629 = vmatprep.subr.mxu0 0.0
  %630 = vmatpush1.msra.mxu0 0.0
  %631 = vmatprep.mubr.f32.mxu0 0.0
  %632 = vmatmul.mubr.f32.gmra.mrb[0].mxu0 %v563
  %v633 = vpop.f32.mrb[0].mxu0
  %v634 = vadd.f32 0.0, %v633
  %v635 = vpop.f32.mrb[0].mxu0
  %636 = vdwg.mxu0
  %v637 = vadd.f32 %v566, %v634
  %v638 = vtanh.pop %v637
  %639 = vst [vmem:[%s565] sm:$0xff] %v638
  %s640 = scalar_lea.vmem [#allocation2], 48
  %v641 = vld [vmem:[%s640] sm:$0xff]
  %642 = vmatprep.subr.mxu0 0.0
  %643 = vmatpush1.msra.mxu0 %v174
  %644 = vmatprep.subr.mxu0 0.0
  %645 = vmatpush1.msra.mxu0 %v175
  %646 = vmatprep.subr.mxu0 0.0
  %647 = vmatpush1.msra.mxu0 %v176
  %648 = vmatprep.subr.mxu0 0.0
  %649 = vmatpush1.msra.mxu0 %v177
  %650 = vmatprep.subr.mxu0 0.0
  %651 = vmatpush1.msra.mxu0 %v178
  %652 = vmatprep.subr.mxu0 0.0
  %653 = vmatpush1.msra.mxu0 %v179
  %654 = vmatprep.subr.mxu0 0.0
  %655 = vmatpush1.msra.mxu0 %v180
  %656 = vmatprep.subr.mxu0 0.0
  %657 = vmatpush1.msra.mxu0 %v181
  %658 = vmatprep.subr.mxu0 0.0
  %659 = vmatpush1.msra.mxu0 %v182
  %660 = vmatprep.subr.mxu0 0.0
  %661 = vmatpush1.msra.mxu0 %v183
  %662 = vmatprep.subr.mxu0 0.0
  %663 = vmatpush1.msra.mxu0 %v184
  %664 = vmatprep.subr.mxu0 0.0
  %665 = vmatpush1.msra.mxu0 %v185
  %666 = vmatprep.subr.mxu0 0.0
  %667 = vmatpush1.msra.mxu0 %v186
  %668 = vmatprep.subr.mxu0 0.0
  %669 = vmatpush1.msra.mxu0 %v187
  %670 = vmatprep.subr.mxu0 0.0
  %671 = vmatpush1.msra.mxu0 %v188
  %672 = vmatprep.subr.mxu0 0.0
  %673 = vmatpush1.msra.mxu0 %v189
  %674 = vmatprep.subr.mxu0 0.0
  %675 = vmatpush1.msra.mxu0 0.0
  %676 = vmatprep.subr.mxu0 0.0
  %677 = vmatpush1.msra.mxu0 0.0
  %678 = vmatprep.subr.mxu0 0.0
  %679 = vmatpush1.msra.mxu0 0.0
  %680 = vmatprep.subr.mxu0 0.0
  %681 = vmatpush1.msra.mxu0 0.0
  %682 = vmatprep.subr.mxu0 0.0
  %683 = vmatpush1.msra.mxu0 0.0
  %684 = vmatprep.subr.mxu0 0.0
  %685 = vmatpush1.msra.mxu0 0.0
  %686 = vmatprep.subr.mxu0 0.0
  %687 = vmatpush1.msra.mxu0 0.0
  %688 = vmatprep.subr.mxu0 0.0
  %689 = vmatpush1.msra.mxu0 0.0
  %690 = vmatprep.subr.mxu0 0.0
  %691 = vmatpush1.msra.mxu0 0.0
  %692 = vmatprep.subr.mxu0 0.0
  %693 = vmatpush1.msra.mxu0 0.0
  %694 = vmatprep.subr.mxu0 0.0
  %695 = vmatpush1.msra.mxu0 0.0
  %696 = vmatprep.subr.mxu0 0.0
  %697 = vmatpush1.msra.mxu0 0.0
  %698 = vmatprep.subr.mxu0 0.0
  %699 = vmatpush1.msra.mxu0 0.0
  %700 = vmatprep.subr.mxu0 0.0
  %701 = vmatpush1.msra.mxu0 0.0
  %702 = vmatprep.subr.mxu0 0.0
  %703 = vmatpush1.msra.mxu0 0.0
  %704 = vmatprep.subr.mxu0 0.0
  %705 = vmatpush1.msra.mxu0 0.0
  %706 = vmatprep.mubr.f32.mxu0 0.0
  %707 = vmatmul.mubr.f32.gmra.mrb[0].mxu0 %v638
  %v708 = vpop.f32.mrb[0].mxu0
  %v709 = vadd.f32 0.0, %v708
  %v710 = vpop.f32.mrb[0].mxu0
  %711 = vdwg.mxu0
  %v712 = vadd.f32 %v641, %v709
  %v713 = vtanh.pop %v712
  %714 = vst [vmem:[%s640] sm:$0xff] %v713
  %s715 = scalar_lea.vmem [#allocation2], 56
  %v716 = vld [vmem:[%s715] sm:$0xff]
  %717 = vmatprep.subr.mxu0 0.0
  %718 = vmatpush1.msra.mxu0 %v174
  %719 = vmatprep.subr.mxu0 0.0
  %720 = vmatpush1.msra.mxu0 %v175
  %721 = vmatprep.subr.mxu0 0.0
  %722 = vmatpush1.msra.mxu0 %v176
  %723 = vmatprep.subr.mxu0 0.0
  %724 = vmatpush1.msra.mxu0 %v177
  %725 = vmatprep.subr.mxu0 0.0
  %726 = vmatpush1.msra.mxu0 %v178
  %727 = vmatprep.subr.mxu0 0.0
  %728 = vmatpush1.msra.mxu0 %v179
  %729 = vmatprep.subr.mxu0 0.0
  %730 = vmatpush1.msra.mxu0 %v180
  %731 = vmatprep.subr.mxu0 0.0
  %732 = vmatpush1.msra.mxu0 %v181
  %733 = vmatprep.subr.mxu0 0.0
  %734 = vmatpush1.msra.mxu0 %v182
  %735 = vmatprep.subr.mxu0 0.0
  %736 = vmatpush1.msra.mxu0 %v183
  %737 = vmatprep.subr.mxu0 0.0
  %738 = vmatpush1.msra.mxu0 %v184
  %739 = vmatprep.subr.mxu0 0.0
  %740 = vmatpush1.msra.mxu0 %v185
  %741 = vmatprep.subr.mxu0 0.0
  %742 = vmatpush1.msra.mxu0 %v186
  %743 = vmatprep.subr.mxu0 0.0
  %744 = vmatpush1.msra.mxu0 %v187
  %745 = vmatprep.subr.mxu0 0.0
  %746 = vmatpush1.msra.mxu0 %v188
  %747 = vmatprep.subr.mxu0 0.0
  %748 = vmatpush1.msra.mxu0 %v189
  %749 = vmatprep.subr.mxu0 0.0
  %750 = vmatpush1.msra.mxu0 0.0
  %751 = vmatprep.subr.mxu0 0.0
  %752 = vmatpush1.msra.mxu0 0.0
  %753 = vmatprep.subr.mxu0 0.0
  %754 = vmatpush1.msra.mxu0 0.0
  %755 = vmatprep.subr.mxu0 0.0
  %756 = vmatpush1.msra.mxu0 0.0
  %757 = vmatprep.subr.mxu0 0.0
  %758 = vmatpush1.msra.mxu0 0.0
  %759 = vmatprep.subr.mxu0 0.0
  %760 = vmatpush1.msra.mxu0 0.0
  %761 = vmatprep.subr.mxu0 0.0
  %762 = vmatpush1.msra.mxu0 0.0
  %763 = vmatprep.subr.mxu0 0.0
  %764 = vmatpush1.msra.mxu0 0.0
  %765 = vmatprep.subr.mxu0 0.0
  %766 = vmatpush1.msra.mxu0 0.0
  %767 = vmatprep.subr.mxu0 0.0
  %768 = vmatpush1.msra.mxu0 0.0
  %769 = vmatprep.subr.mxu0 0.0
  %770 = vmatpush1.msra.mxu0 0.0
  %771 = vmatprep.subr.mxu0 0.0
  %772 = vmatpush1.msra.mxu0 0.0
  %773 = vmatprep.subr.mxu0 0.0
  %774 = vmatpush1.msra.mxu0 0.0
  %775 = vmatprep.subr.mxu0 0.0
  %776 = vmatpush1.msra.mxu0 0.0
  %777 = vmatprep.subr.mxu0 0.0
  %778 = vmatpush1.msra.mxu0 0.0
  %779 = vmatprep.subr.mxu0 0.0
  %780 = vmatpush1.msra.mxu0 0.0
  %781 = vmatprep.mubr.f32.mxu0 0.0
  %782 = vmatmul.mubr.f32.gmra.mrb[0].mxu0 %v713
  %v783 = vpop.f32.mrb[0].mxu0
  %v784 = vadd.f32 0.0, %v783
  %v785 = vpop.f32.mrb[0].mxu0
  %786 = vdwg.mxu0
  %v787 = vadd.f32 %v716, %v784
  %v788 = vtanh.pop %v787
  %789 = vst [vmem:[%s715] sm:$0xff] %v788
  %790 = vst [vmem:[#allocation3] sm:$0xff] %v788
  %v791 = vld [vmem:[%s3] sm:$0xff]
  %v792 = vld [vmem:[%s3 + $0x8] sm:$0xff]
  %v793 = vld [vmem:[%s3 + $0x10] sm:$0xff]
  %v794 = vld [vmem:[%s3 + $0x18] sm:$0xff]
  %v795 = vld [vmem:[%s3 + $0x20] sm:$0xff]
  %v796 = vld [vmem:[%s3 + $0x28] sm:$0xff]
  %v797 = vld [vmem:[%s3 + $0x30] sm:$0xff]
  %v798 = vld [vmem:[%s3 + $0x38] sm:$0xff]
  %v799 = vld [vmem:[%s3 + $0x40] sm:$0xff]
  %v800 = vld [vmem:[%s3 + $0x48] sm:$0xff]
  %v801 = vld [vmem:[%s3 + $0x50] sm:$0xff]
  %v802 = vld [vmem:[%s3 + $0x58] sm:$0xff]
  %v803 = vld [vmem:[%s3 + $0x60] sm:$0xff]
  %v804 = vld [vmem:[%s3 + $0x68] sm:$0xff]
  %v805 = vld [vmem:[%s3 + $0x70] sm:$0xff]
  %v806 = vld [vmem:[%s3 + $0x78] sm:$0xff]
  %v807 = vld [vmem:[#allocation2] sm:$0xff]
  %v808 = vld [vmem:[#allocation2 + $0x8] sm:$0xff]
  %v809 = vld [vmem:[#allocation2 + $0x10] sm:$0xff]
  %v810 = vld [vmem:[#allocation2 + $0x18] sm:$0xff]
  %v811 = vld [vmem:[#allocation2 + $0x20] sm:$0xff]
  %v812 = vld [vmem:[#allocation2 + $0x28] sm:$0xff]
  %v813 = vld [vmem:[#allocation2 + $0x30] sm:$0xff]
  %v814 = vld [vmem:[#allocation2 + $0x38] sm:$0xff]
  %815 = vmatprep.subr.mxu0 0.0
  %816 = vmatpush1.msra.mxu0 %v791
  %817 = vmatprep.subr.mxu0 0.0
  %818 = vmatpush1.msra.mxu0 %v792
  %819 = vmatprep.subr.mxu0 0.0
  %820 = vmatpush1.msra.mxu0 %v793
  %821 = vmatprep.subr.mxu0 0.0
  %822 = vmatpush1.msra.mxu0 %v794
  %823 = vmatprep.subr.mxu0 0.0
  %824 = vmatpush1.msra.mxu0 %v795
  %825 = vmatprep.subr.mxu0 0.0
  %826 = vmatpush1.msra.mxu0 %v796
  %827 = vmatprep.subr.mxu0 0.0
  %828 = vmatpush1.msra.mxu0 %v797
  %829 = vmatprep.subr.mxu0 0.0
  %830 = vmatpush1.msra.mxu0 %v798
  %831 = vmatprep.subr.mxu0 0.0
  %832 = vmatpush1.msra.mxu0 %v799
  %833 = vmatprep.subr.mxu0 0.0
  %834 = vmatpush1.msra.mxu0 %v800
  %835 = vmatprep.subr.mxu0 0.0
  %836 = vmatpush1.msra.mxu0 %v801
  %837 = vmatprep.subr.mxu0 0.0
  %838 = vmatpush1.msra.mxu0 %v802
  %839 = vmatprep.subr.mxu0 0.0
  %840 = vmatpush1.msra.mxu0 %v803
  %841 = vmatprep.subr.mxu0 0.0
  %842 = vmatpush1.msra.mxu0 %v804
  %843 = vmatprep.subr.mxu0 0.0
  %844 = vmatpush1.msra.mxu0 %v805
  %845 = vmatprep.subr.mxu0 0.0
  %846 = vmatpush1.msra.mxu0 %v806
  %847 = vmatprep.subr.mxu0 0.0
  %848 = vmatpush1.msra.mxu0 0.0
  %849 = vmatprep.subr.mxu0 0.0
  %850 = vmatpush1.msra.mxu0 0.0
  %851 = vmatprep.subr.mxu0 0.0
  %852 = vmatpush1.msra.mxu0 0.0
  %853 = vmatprep.subr.mxu0 0.0
  %854 = vmatpush1.msra.mxu0 0.0
  %855 = vmatprep.subr.mxu0 0.0
  %856 = vmatpush1.msra.mxu0 0.0
  %857 = vmatprep.subr.mxu0 0.0
  %858 = vmatpush1.msra.mxu0 0.0
  %859 = vmatprep.subr.mxu0 0.0
  %860 = vmatpush1.msra.mxu0 0.0
  %861 = vmatprep.subr.mxu0 0.0
  %862 = vmatpush1.msra.mxu0 0.0
  %863 = vmatprep.subr.mxu0 0.0
  %864 = vmatpush1.msra.mxu0 0.0
  %865 = vmatprep.subr.mxu0 0.0
  %866 = vmatpush1.msra.mxu0 0.0
  %867 = vmatprep.subr.mxu0 0.0
  %868 = vmatpush1.msra.mxu0 0.0
  %869 = vmatprep.subr.mxu0 0.0
  %870 = vmatpush1.msra.mxu0 0.0
  %871 = vmatprep.subr.mxu0 0.0
  %872 = vmatpush1.msra.mxu0 0.0
  %873 = vmatprep.subr.mxu0 0.0
  %874 = vmatpush1.msra.mxu0 0.0
  %875 = vmatprep.subr.mxu0 0.0
  %876 = vmatpush1.msra.mxu0 0.0
  %877 = vmatprep.subr.mxu0 0.0
  %878 = vmatpush1.msra.mxu0 0.0
  %879 = vmatprep.mubr.f32.mxu0 0.0
  %880 = vmatmul.mubr.f32.gmra.mrb[0].mxu0 %v807
  %v881 = vpop.f32.mrb[0].mxu0
  %v882 = vadd.f32 0.0, %v881
  %v883 = vpop.f32.mrb[0].mxu0
  %884 = vmatprep.mubr.f32.mxu0 0.0
  %885 = vmatmul.mubr.f32.gmra.mrb[0].mxu0 %v808
  %v886 = vpop.f32.mrb[0].mxu0
  %v887 = vadd.f32 0.0, %v886
  %v888 = vpop.f32.mrb[0].mxu0
  %889 = vmatprep.mubr.f32.mxu0 0.0
  %890 = vmatmul.mubr.f32.gmra.mrb[0].mxu0 %v809
  %v891 = vpop.f32.mrb[0].mxu0
  %v892 = vadd.f32 0.0, %v891
  %v893 = vpop.f32.mrb[0].mxu0
  %894 = vmatprep.mubr.f32.mxu0 0.0
  %895 = vmatmul.mubr.f32.gmra.mrb[0].mxu0 %v810
  %v896 = vpop.f32.mrb[0].mxu0
  %v897 = vadd.f32 0.0, %v896
  %v898 = vpop.f32.mrb[0].mxu0
  %899 = vmatprep.mubr.f32.mxu0 0.0
  %900 = vmatmul.mubr.f32.gmra.mrb[0].mxu0 %v811
  %v901 = vpop.f32.mrb[0].mxu0
  %v902 = vadd.f32 0.0, %v901
  %v903 = vpop.f32.mrb[0].mxu0
  %904 = vmatprep.mubr.f32.mxu0 0.0
  %905 = vmatmul.mubr.f32.gmra.mrb[0].mxu0 %v812
  %v906 = vpop.f32.mrb[0].mxu0
  %v907 = vadd.f32 0.0, %v906
  %v908 = vpop.f32.mrb[0].mxu0
  %909 = vmatprep.mubr.f32.mxu0 0.0
  %910 = vmatmul.mubr.f32.gmra.mrb[0].mxu0 %v813
  %v911 = vpop.f32.mrb[0].mxu0
  %v912 = vadd.f32 0.0, %v911
  %v913 = vpop.f32.mrb[0].mxu0
  %914 = vmatprep.mubr.f32.mxu0 0.0
  %915 = vmatmul.mubr.f32.gmra.mrb[0].mxu0 %v814
  %v916 = vpop.f32.mrb[0].mxu0
  %v917 = vadd.f32 0.0, %v916
  %v918 = vpop.f32.mrb[0].mxu0
  %919 = vdwg.mxu0
  %920 = vst [vmem:[%s4] sm:$0xff] %v882
  %921 = vst [vmem:[%s4 + $0x8] sm:$0xff] %v887
  %922 = vst [vmem:[%s4 + $0x10] sm:$0xff] %v892
  %923 = vst [vmem:[%s4 + $0x18] sm:$0xff] %v897
  %924 = vst [vmem:[%s4 + $0x20] sm:$0xff] %v902
  %925 = vst [vmem:[%s4 + $0x28] sm:$0xff] %v907
  %926 = vst [vmem:[%s4 + $0x30] sm:$0xff] %v912
  %927 = vst [vmem:[%s4 + $0x38] sm:$0xff] %v917
  // Predicated region
  $region22: #{rnn_model_forward.1} parent=0 // pred_check
    _
  $region23: #{rnn_model_forward.1} parent=0 // pred_check_branch
    %929 = sbr.rel (0) target = $region25
  $region24: #{rnn_model_forward.1} parent=0 // pred_region
    _
  $region25: #{rnn_model_forward.1} parent=0 // pred_fallthru
    _
  // Predicated region
  $region26: #{rnn_model_forward.1} parent=0 // pred_check
    _
  $region27: #{rnn_model_forward.1} parent=0 // pred_check_branch
    %931 = sbr.rel (0) target = $region29
  $region28: #{rnn_model_forward.1} parent=0 // pred_region
    _
  $region29: #{rnn_model_forward.1} parent=0 // pred_fallthru
    _

</llo_original>
